<compile_context>
chip_gen: v7x
topology: tpu7x:2x2x1
jax: 0.10.0
libtpu: 0.0.40
codegen_flags: <defaults>
</compile_context>

<pallas_src>
import jax
import jax.numpy as jnp
from jax.experimental import pallas as pl
from jax.experimental.pallas import tpu as pltpu

K_REAL = 1000      # resnet50 feature width (contraction dim; Mosaic pads the ragged K tile)
N_REAL = 10        # number of classes
N_PAD = 128        # lane-dense padded class dim
NEG_BIG = -1e30    # bias for padded classes -> softmax prob exactly 0
MAX_TB = 1024      # f32 feats tile = ~4 MiB/buffer; x2 buffers + weights + out << 32 MiB scoped VMEM


def head_kernel(x_ref, a_ref, wf_ref, wa_ref, b_ref, o_ref):
    """Fused relu -> (dropout eval: identity) -> concat-linear -> softmax.

    x_ref : [TB, 1000] f32   backbone features (full-K block, streamed over batch)
    a_ref : [TB, 1]    f32   add_variable column
    wf_ref: [1000,128] bf16  transposed+padded Linear weight (feature rows)
    wa_ref: [1, 128]   f32   Linear weight row for the add_variable column
    b_ref : [1, 128]   f32   bias; padded classes hold -1e30 (masked out of softmax)
    o_ref : [TB, 128]  bf16  softmax output (only [:, :10] is meaningful)
    """
    # ReLU in f32 (v5e VPU has no bf16 path), single cast to bf16 for the MXU.
    # Dropout(p=0.5) in eval mode is identity.
    # TODO(synk): training-mode dropout would use pltpu.prng_seed + stateful_bernoulli.
    x = jnp.maximum(x_ref[...], 0.0).astype(jnp.bfloat16)

    # concat([relu(x), a], 1) @ W.T + b  ==  relu(x) @ Wf + a * Wa + b
    logits = jnp.dot(x, wf_ref[...], preferred_element_type=jnp.float32)
    logits = logits + a_ref[...] * wa_ref[...] + b_ref[...]

    # Numerically-stable softmax over the padded class dim; padded logits are
    # ~-1e30 so exp() drives them to exactly 0.  Exact f32 reciprocal (the
    # approx reciprocal's error breaks sum-to-1 and costs nothing to avoid in
    # this HBM-bound kernel).
    m = jnp.max(logits, axis=1, keepdims=True)
    e = jnp.exp(logits - m)
    denom = jnp.sum(e, axis=1, keepdims=True)
    o_ref[...] = (e * (1.0 / denom)).astype(o_ref.dtype)


def prepare_head_params(w_fc, b_fc):
    """One-time layout prep (NOT in the per-call path): transpose, pad, cast.

    w_fc: [10, 1001] Linear weight, b_fc: [10] bias.
    Returns wf [1000,128] bf16, wa [1,128] f32, b [1,128] f32.
    """
    wt = jnp.transpose(w_fc).astype(jnp.float32)            # [1001, 10]
    wf = jnp.zeros((K_REAL, N_PAD), jnp.bfloat16)
    wf = wf.at[:, :N_REAL].set(wt[:K_REAL].astype(jnp.bfloat16))
    wa = jnp.zeros((1, N_PAD), jnp.float32).at[0, :N_REAL].set(wt[K_REAL])
    b = jnp.full((1, N_PAD), NEG_BIG, jnp.float32)
    b = b.at[0, :N_REAL].set(b_fc.astype(jnp.float32))
    return wf, wa, b


def _choose_batch_tile(B):
    """Batch tile: large (amortize ~0.35 us/grid-step), but >=2 grid steps when
    possible so the 'parallel' batch axis can shard across both v7x TCs.
    Sublane dim stays a multiple of 8, or equals the full batch for tiny B."""
    if B <= 16:
        return B                                    # single block == full array dims
    tb = min(MAX_TB, B)
    if pl.cdiv(B, tb) < 2:
        tb = ((pl.cdiv(B, 2) + 7) // 8) * 8         # ~2 blocks, 8-aligned sublanes
    return tb


@jax.jit
def model_head(feats, add_variable, wf, wa, b):
    """feats: [B, 1000] f32, add_variable: [B] -> softmax probs [B, 10] f32."""
    B, F = feats.shape
    TB = _choose_batch_tile(B)
    a_col = add_variable.reshape(B, 1).astype(jnp.float32)   # metadata-only reshape

    out = pl.pallas_call(
        head_kernel,
        out_shape=jax.ShapeDtypeStruct((B, N_PAD), jnp.bfloat16),
        grid_spec=pltpu.PrefetchScalarGridSpec(
            num_scalar_prefetch=0,
            grid=(pl.cdiv(B, TB),),                 # ragged last block handled by Pallas
            in_specs=[
                pl.BlockSpec((TB, F), lambda i: (i, 0)),        # feats streamed over B, full K
                pl.BlockSpec((TB, 1), lambda i: (i, 0)),        # add_variable column
                pl.BlockSpec((F, N_PAD), lambda i: (0, 0)),     # weights stay VMEM-resident
                pl.BlockSpec((1, N_PAD), lambda i: (0, 0)),
                pl.BlockSpec((1, N_PAD), lambda i: (0, 0)),
            ],
            out_specs=pl.BlockSpec((TB, N_PAD), lambda i: (i, 0)),
        ),
        compiler_params=pltpu.CompilerParams(
            # Batch axis is independent -> shard across both TCs on v7x.
            dimension_semantics=("parallel",),
        ),
    )(feats, a_col, wf, wa, b)

    # Tiny [B,10] slice + upcast to match the module's f32 softmax output.
    return out[:B, :N_REAL].astype(jnp.float32)


def backbone_stub(x_img, w_stub, b_stub):
    # TODO(synk): the real `net` is torchvision resnet50 (external to this Module);
    # replaced by a deterministic flatten+linear stub producing 1000 features.
    # TODO(synk): architecturally, emit bf16 features / fuse this head as the
    # backbone's final-matmul epilogue so feats never round-trip through HBM.
    B = x_img.shape[0]
    flat = x_img.reshape(B, -1)
    return flat @ w_stub + b_stub            # [B, 1000] f32


if __name__ == "__main__":
    key = jax.random.PRNGKey(0)
    k_img, k_add, k_w, k_b, k_sw, k_sb = jax.random.split(key, 6)

    # Small image input (stand-in for resnet50's NCHW input) and add_variable.
    B, C, H, W = 2, 3, 16, 16
    x_img = jax.random.normal(k_img, (B, C, H, W), dtype=jnp.float32)
    add_variable = jax.random.normal(k_add, (B,), dtype=jnp.float32)

    # Deterministic parameters.
    w_fc = jax.random.normal(k_w, (10, 1001), dtype=jnp.float32) * 0.02   # Linear(1001, 10)
    b_fc = jax.random.normal(k_b, (10,), dtype=jnp.float32) * 0.02
    w_stub = jax.random.normal(k_sw, (C * H * W, 1000), dtype=jnp.float32) * 0.02
    b_stub = jax.random.normal(k_sb, (1000,), dtype=jnp.float32) * 0.02

    # One-time layout prep (transpose + pad + cast), outside the per-call path.
    wf, wa, b = prepare_head_params(w_fc, b_fc)

    feats = backbone_stub(x_img, w_stub, b_stub)           # [B, 1000]
    out = model_head(feats, add_variable, wf, wa, b)       # [B, 10]
    out = jax.block_until_ready(out)

    # Pure-JAX f32 reference of the original module's head.
    h = jnp.maximum(feats, 0.0)
    cat = jnp.concatenate([h, add_variable[:, None]], axis=1)
    ref = jax.nn.softmax(cat @ w_fc.T + b_fc, axis=1)

    assert out.shape == (B, 10)
    # Softmax math is f32 with an exact reciprocal; only the bf16 output store
    # quantizes (<= ~2e-3 row-sum error worst case), hence the tolerances.
    assert bool(jnp.all(jnp.abs(jnp.sum(out, axis=1) - 1.0) < 5e-3))
    assert bool(jnp.max(jnp.abs(out - ref)) < 5e-2)
    print("KERNEL_OK")
</pallas_src>

<mosaic_0001>
module attributes {stable_mosaic.version = 11 : i64} {
  func.func @head_kernel(%arg0: i32, %arg1: memref<2x1000xf32, #tpu.memory_space<vmem>>, %arg2: memref<2x1xf32, #tpu.memory_space<vmem>>, %arg3: memref<1000x128xbf16, #tpu.memory_space<vmem>>, %arg4: memref<1x128xf32, #tpu.memory_space<vmem>>, %arg5: memref<1x128xf32, #tpu.memory_space<vmem>>, %arg6: memref<2x128xbf16, #tpu.memory_space<vmem>>) attributes {dimension_semantics = [#tpu.dimension_semantics<parallel>], iteration_bounds = array<i64: 1>, scalar_prefetch = 0 : i64, scratch_operands = 0 : i64, tpu.core_type = #tpu.core_type<tc>, window_params = [{transform_indices = @transform_0, window_bounds = array<i64: 2, 1000>}, {transform_indices = @transform_1, window_bounds = array<i64: 2, 1>}, {pipeline_mode = #tpu.pipeline_mode<synchronous>, transform_indices = @transform_2, window_bounds = array<i64: 1000, 128>}, {pipeline_mode = #tpu.pipeline_mode<synchronous>, transform_indices = @transform_3, window_bounds = array<i64: 1, 128>}, {pipeline_mode = #tpu.pipeline_mode<synchronous>, transform_indices = @transform_4, window_bounds = array<i64: 1, 128>}, {transform_indices = @transform_5, window_bounds = array<i64: 2, 128>}]} {
    %c0 = arith.constant 0 : index
    %c0_0 = arith.constant 0 : index
    %0 = vector.load %arg1[%c0, %c0_0] : memref<2x1000xf32, #tpu.memory_space<vmem>>, vector<2x1000xf32>
    %cst = arith.constant 0.000000e+00 : f32
    %1 = vector.broadcast %cst : f32 to vector<2x1000xf32>
    %2 = arith.maximumf %0, %1 : vector<2x1000xf32>
    %3 = arith.truncf %2 : vector<2x1000xf32> to vector<2x1000xbf16>
    %c0_1 = arith.constant 0 : index
    %c0_2 = arith.constant 0 : index
    %4 = vector.load %arg3[%c0_1, %c0_2] : memref<1000x128xbf16, #tpu.memory_space<vmem>>, vector<1000x128xbf16>
    %cst_3 = arith.constant dense<0.000000e+00> : vector<2x128xf32>
    %5 = tpu.matmul %3, %4, %cst_3 {dimension_numbers = #tpu.dot_dimension_numbers<[1], [0], [0], [1], [0, 0, 1, 1], [], []>} : vector<2x1000xbf16>, vector<1000x128xbf16>, vector<2x128xf32> -> vector<2x128xf32>
    %c0_4 = arith.constant 0 : index
    %c0_5 = arith.constant 0 : index
    %6 = vector.load %arg2[%c0_4, %c0_5] : memref<2x1xf32, #tpu.memory_space<vmem>>, vector<2x1xf32>
    %c0_6 = arith.constant 0 : index
    %c0_7 = arith.constant 0 : index
    %7 = vector.load %arg4[%c0_6, %c0_7] : memref<1x128xf32, #tpu.memory_space<vmem>>, vector<1x128xf32>
    %8 = vector.broadcast %6 : vector<2x1xf32> to vector<2x128xf32>
    %9 = vector.broadcast %7 : vector<1x128xf32> to vector<2x128xf32>
    %10 = arith.mulf %8, %9 : vector<2x128xf32>
    %11 = arith.addf %5, %10 : vector<2x128xf32>
    %c0_8 = arith.constant 0 : index
    %c0_9 = arith.constant 0 : index
    %12 = vector.load %arg5[%c0_8, %c0_9] : memref<1x128xf32, #tpu.memory_space<vmem>>, vector<1x128xf32>
    %13 = vector.broadcast %12 : vector<1x128xf32> to vector<2x128xf32>
    %14 = arith.addf %11, %13 : vector<2x128xf32>
    %cst_10 = arith.constant dense<0xFF800000> : vector<2xf32>
    %15 = vector.multi_reduction <maximumf>, %14, %cst_10 [1] : vector<2x128xf32> to vector<2xf32>
    %16 = vector.shape_cast %15 : vector<2xf32> to vector<2x1xf32>
    %17 = vector.broadcast %16 : vector<2x1xf32> to vector<2x128xf32>
    %18 = arith.subf %14, %17 : vector<2x128xf32>
    %19 = math.exp %18 : vector<2x128xf32>
    %cst_11 = arith.constant dense<0.000000e+00> : vector<2xf32>
    %20 = vector.multi_reduction <add>, %19, %cst_11 [1] : vector<2x128xf32> to vector<2xf32>
    %21 = vector.shape_cast %20 : vector<2xf32> to vector<2x1xf32>
    %cst_12 = arith.constant 1.000000e+00 : f32
    %22 = vector.broadcast %cst_12 : f32 to vector<2x1xf32>
    %23 = arith.divf %22, %21 : vector<2x1xf32>
    %24 = vector.broadcast %23 : vector<2x1xf32> to vector<2x128xf32>
    %25 = arith.mulf %19, %24 : vector<2x128xf32>
    %26 = arith.truncf %25 : vector<2x128xf32> to vector<2x128xbf16>
    %c0_13 = arith.constant 0 : index
    %c0_14 = arith.constant 0 : index
    %27 = vector.load %arg6[%c0_13, %c0_14] : memref<2x128xbf16, #tpu.memory_space<vmem>>, vector<2x128xbf16>
    tpu.vector_store %arg6[%c0_13, %c0_14], %26 {strides = array<i32>} : memref<2x128xbf16, #tpu.memory_space<vmem>>, vector<2x128xbf16>,
    return
  }
  func.func @transform_0(%arg0: i32) -> (i32, i32) {
    %c0_i32 = arith.constant 0 : i32
    %c0_i32_0 = arith.constant 0 : i32
    return %arg0, %c0_i32 : i32, i32
  }
  func.func @transform_1(%arg0: i32) -> (i32, i32) {
    %c0_i32 = arith.constant 0 : i32
    %c0_i32_0 = arith.constant 0 : i32
    return %arg0, %c0_i32 : i32, i32
  }
  func.func @transform_2(%arg0: i32) -> (i32, i32) {
    %c0_i32 = arith.constant 0 : i32
    %c0_i32_0 = arith.constant 0 : i32
    %c0_i32_1 = arith.constant 0 : i32
    return %c0_i32, %c0_i32_0 : i32, i32
  }
  func.func @transform_3(%arg0: i32) -> (i32, i32) {
    %c0_i32 = arith.constant 0 : i32
    %c0_i32_0 = arith.constant 0 : i32
    %c0_i32_1 = arith.constant 0 : i32
    return %c0_i32, %c0_i32_0 : i32, i32
  }
  func.func @transform_4(%arg0: i32) -> (i32, i32) {
    %c0_i32 = arith.constant 0 : i32
    %c0_i32_0 = arith.constant 0 : i32
    %c0_i32_1 = arith.constant 0 : i32
    return %c0_i32, %c0_i32_0 : i32, i32
  }
  func.func @transform_5(%arg0: i32) -> (i32, i32) {
    %c0_i32 = arith.constant 0 : i32
    %c0_i32_0 = arith.constant 0 : i32
    return %arg0, %c0_i32 : i32, i32
  }
}

</mosaic_0001>

<llo_original>
// kernel: model_head.1
$region0: #{model_head.1}
  #allocation0 [shape = 'u32[]', space=smem, size = 0x4, offset = 0x4, fixed_abs, tag = 'smem constant byte address 0x4 - core index']
  #allocation1 [shape = 'u32[144,128]{1,0:T(1,128)}', space=vmem, size = 0x12000, scoped, tag = 'internal scratch']
  %s0 = inlined_call_operand.hbm [shape: f32[2,1000], index: 0, kind: input, shape index: {}]
  %s1 = inlined_call_operand.vmem [shape: f32[2,1], index: 1, kind: input, shape index: {}]
  %s2 = inlined_call_operand.hbm [shape: bf16[1000,128], index: 2, kind: input, shape index: {}]
  %s3 = inlined_call_operand.vmem [shape: f32[1,128], index: 3, kind: input, shape index: {}]
  %s4 = inlined_call_operand.vmem [shape: f32[1,128], index: 4, kind: input, shape index: {}]
  %s5 = inlined_call_operand.vmem [shape: bf16[2,128], index: 5, kind: output, shape index: {}]
  %s6 = sld [smem:[#allocation0]]
  $region38: #{model_head.1} parent=0
    _
  %s8 = ssub.s32 1, %s6
  %s9 = scalar_select 0, %s8, %s6
  $region1: #{model_head.1} parent=0
    #allocation2 [shape = 'u8[8192]{0}', space=vmem, size = 0x2000, scoped, tag = 'input window, operand 0, single buffered']
    #allocation3 [shape = 's32[1]{0}', space=sflag, size = 0x4, scoped, tag = 'scoped memory for model_head.1']
    #allocation4 [shape = 'u8[256000]{0}', space=vmem, size = 0x3e800, scoped, tag = 'input window, operand 2, single buffered']
    #allocation5 [shape = 's32[1]{0}', space=sflag, size = 0x4, scoped, tag = 'scoped memory for model_head.1']
    %10 = vsyncpa [#allocation3], 0
    %11 = vsyncpa [#allocation5], 0
    // Predicated region
    $region2: #{model_head.1} parent=1 // pred_check
      _
    $region3: #{model_head.1} parent=1 // pred_check_branch
      %13 = sbr.rel (0) target = $region5
    $region4: #{model_head.1} parent=1 // pred_region
      %s15 = ssub.s32 256, 256
      %16 = vsyncadd [#allocation3], %s15
      %s18 = sshll.u32 [#allocation2], 4
      %s19 = int_to_ptr.vmem [resolvable:$true] %s18
      %21 = dma.hbm_to_vmem [thread:$0]  %s0, 256, %s19, [#allocation3]
    $region5: #{model_head.1} parent=1 // pred_fallthru
      _
    // Predicated region
    $region6: #{model_head.1} parent=1 // pred_check
      _
    $region7: #{model_head.1} parent=1 // pred_check_branch
      %23 = sbr.rel (0) target = $region9
    $region8: #{model_head.1} parent=1 // pred_region
      _
    $region9: #{model_head.1} parent=1 // pred_fallthru
      _
    // Predicated region
    $region10: #{model_head.1} parent=1 // pred_check
      _
    $region11: #{model_head.1} parent=1 // pred_check_branch
      %25 = sbr.rel (0) target = $region13
    $region12: #{model_head.1} parent=1 // pred_region
      %s27 = ssub.s32 8000, 8000
      %28 = vsyncadd [#allocation5], %s27
      %s29 = sshll.u32 [#allocation4], 4
      %s30 = int_to_ptr.vmem [resolvable:$true] %s29
      %35 = dma.hbm_to_vmem [thread:$0]  %s2, 8000, %s30, [#allocation5], 64, 64, 4
    $region13: #{model_head.1} parent=1 // pred_fallthru
      _
    // Predicated region
    $region14: #{model_head.1} parent=1 // pred_check
      _
    $region15: #{model_head.1} parent=1 // pred_check_branch
      %37 = sbr.rel (0) target = $region17
    $region16: #{model_head.1} parent=1 // pred_region
      _
    $region17: #{model_head.1} parent=1 // pred_fallthru
      _
    // Predicated region
    $region18: #{model_head.1} parent=1 // pred_check
      _
    $region19: #{model_head.1} parent=1 // pred_check_branch
      %39 = sbr.rel (0) target = $region21
    $region20: #{model_head.1} parent=1 // pred_region
      _
    $region21: #{model_head.1} parent=1 // pred_fallthru
      _
    // Predicated region
    $region22: #{model_head.1} parent=1 // pred_check
      _
    $region23: #{model_head.1} parent=1 // pred_check_branch
      %41 = sbr.rel (0) target = $region25
    $region24: #{model_head.1} parent=1 // pred_region
      %42 = dma.done [#allocation3], 256
    $region25: #{model_head.1} parent=1 // pred_fallthru
      _
    // Predicated region
    $region26: #{model_head.1} parent=1 // pred_check
      _
    $region27: #{model_head.1} parent=1 // pred_check_branch
      %44 = sbr.rel (0) target = $region29
    $region28: #{model_head.1} parent=1 // pred_region
      %45 = dma.done [#allocation5], 8000
    $region29: #{model_head.1} parent=1 // pred_fallthru
      _
    %v47 = vld [vmem:[#allocation2] sm:$0xff]
    %v48 = vld [vmem:[#allocation2 + $0x8] sm:$0xff]
    %v49 = vmax.f32 %v47, 0.0
    %v50 = vmax.f32 %v48, 0.0
    %v53 = vcombine.high %v49, %v49
    %v55 = vunpack.c.l.s4 1983009808
    %v56 = vunpack.c.0.s8 %v55
    %v57 = vlaneseq
    %v58 = vshrl.u32 %v57, 7
    %v59 = vsub.s32 %v56, %v58
    %v60 = vrot.slane %v49, %v59
    %v62 = vunpack.c.l.s4 1983009808
    %v63 = vunpack.c.0.s8 %v62
    %v64 = vlaneseq
    %v65 = vshrl.u32 %v64, 7
    %v66 = vsub.s32 %v63, %v65
    %v67 = vrot.slane %v53, %v66
    %v68 = vcombine.high %v60, %v60
    %v69 = vcombine.high %v67, %v67
    %v70 = vcombine.high %v50, %v50
    %v72 = vunpack.c.l.s4 1983009808
    %v73 = vunpack.c.0.s8 %v72
    %v74 = vlaneseq
    %v75 = vshrl.u32 %v74, 7
    %v76 = vsub.s32 %v73, %v75
    %v77 = vrot.slane %v50, %v76
    %v79 = vunpack.c.l.s4 1983009808
    %v80 = vunpack.c.0.s8 %v79
    %v81 = vlaneseq
    %v82 = vshrl.u32 %v81, 7
    %v83 = vsub.s32 %v80, %v82
    %v84 = vrot.slane %v70, %v83
    %v85 = vcombine.high %v77, %v77
    %v86 = vcombine.high %v84, %v84
    %v95 = vpack.c.bf16 %v60, %v60
    %v96 = vpack.c.bf16 %v68, %v68
    %v97 = vpack.c.bf16 %v67, %v67
    %v98 = vpack.c.bf16 %v69, %v69
    %v99 = vpack.c.bf16 %v77, %v77
    %v100 = vpack.c.bf16 %v85, %v85
    %v101 = vpack.c.bf16 %v84, %v84
    %v102 = vpack.c.bf16 %v86, %v86
    %v103 = vld [vmem:[#allocation4] sm:$0xf]
    %v104 = vld [vmem:[#allocation4 + $0x4] sm:$0xf]
    %v105 = vld [vmem:[#allocation4 + $0x8] sm:$0xf]
    %v106 = vld [vmem:[#allocation4 + $0xc] sm:$0xf]
    %v107 = vld [vmem:[#allocation4 + $0x10] sm:$0xf]
    %v108 = vld [vmem:[#allocation4 + $0x14] sm:$0xf]
    %v109 = vld [vmem:[#allocation4 + $0x18] sm:$0xf]
    %v110 = vld [vmem:[#allocation4 + $0x1c] sm:$0xf]
    %v111 = vld [vmem:[#allocation4 + $0x20] sm:$0xf]
    %v112 = vld [vmem:[#allocation4 + $0x24] sm:$0xf]
    %v113 = vld [vmem:[#allocation4 + $0x28] sm:$0xf]
    %v114 = vld [vmem:[#allocation4 + $0x2c] sm:$0xf]
    %v115 = vld [vmem:[#allocation4 + $0x30] sm:$0xf]
    %v116 = vld [vmem:[#allocation4 + $0x34] sm:$0xf]
    %v117 = vld [vmem:[#allocation4 + $0x38] sm:$0xf]
    %v118 = vld [vmem:[#allocation4 + $0x3c] sm:$0xf]
    %v119 = vld [vmem:[#allocation4 + $0x40] sm:$0xf]
    %v120 = vld [vmem:[#allocation4 + $0x44] sm:$0xf]
    %v121 = vld [vmem:[#allocation4 + $0x48] sm:$0xf]
    %v122 = vld [vmem:[#allocation4 + $0x4c] sm:$0xf]
    %v123 = vld [vmem:[#allocation4 + $0x50] sm:$0xf]
    %v124 = vld [vmem:[#allocation4 + $0x54] sm:$0xf]
    %v125 = vld [vmem:[#allocation4 + $0x58] sm:$0xf]
    %v126 = vld [vmem:[#allocation4 + $0x5c] sm:$0xf]
    %v127 = vld [vmem:[#allocation4 + $0x60] sm:$0xf]
    %v128 = vld [vmem:[#allocation4 + $0x64] sm:$0xf]
    %v129 = vld [vmem:[#allocation4 + $0x68] sm:$0xf]
    %v130 = vld [vmem:[#allocation4 + $0x6c] sm:$0xf]
    %v131 = vld [vmem:[#allocation4 + $0x70] sm:$0xf]
    %v132 = vld [vmem:[#allocation4 + $0x74] sm:$0xf]
    %v133 = vld [vmem:[#allocation4 + $0x78] sm:$0xf]
    %v134 = vld [vmem:[#allocation4 + $0x7c] sm:$0xf]
    %v135 = vld [vmem:[#allocation4 + $0x80] sm:$0xf]
    %v136 = vld [vmem:[#allocation4 + $0x84] sm:$0xf]
    %v137 = vld [vmem:[#allocation4 + $0x88] sm:$0xf]
    %v138 = vld [vmem:[#allocation4 + $0x8c] sm:$0xf]
    %v139 = vld [vmem:[#allocation4 + $0x90] sm:$0xf]
    %v140 = vld [vmem:[#allocation4 + $0x94] sm:$0xf]
    %v141 = vld [vmem:[#allocation4 + $0x98] sm:$0xf]
    %v142 = vld [vmem:[#allocation4 + $0x9c] sm:$0xf]
    %v143 = vld [vmem:[#allocation4 + $0xa0] sm:$0xf]
    %v144 = vld [vmem:[#allocation4 + $0xa4] sm:$0xf]
    %v145 = vld [vmem:[#allocation4 + $0xa8] sm:$0xf]
    %v146 = vld [vmem:[#allocation4 + $0xac] sm:$0xf]
    %v147 = vld [vmem:[#allocation4 + $0xb0] sm:$0xf]
    %v148 = vld [vmem:[#allocation4 + $0xb4] sm:$0xf]
    %v149 = vld [vmem:[#allocation4 + $0xb8] sm:$0xf]
    %v150 = vld [vmem:[#allocation4 + $0xbc] sm:$0xf]
    %v151 = vld [vmem:[#allocation4 + $0xc0] sm:$0xf]
    %v152 = vld [vmem:[#allocation4 + $0xc4] sm:$0xf]
    %v153 = vld [vmem:[#allocation4 + $0xc8] sm:$0xf]
    %v154 = vld [vmem:[#allocation4 + $0xcc] sm:$0xf]
    %v155 = vld [vmem:[#allocation4 + $0xd0] sm:$0xf]
    %v156 = vld [vmem:[#allocation4 + $0xd4] sm:$0xf]
    %v157 = vld [vmem:[#allocation4 + $0xd8] sm:$0xf]
    %v158 = vld [vmem:[#allocation4 + $0xdc] sm:$0xf]
    %v159 = vld [vmem:[#allocation4 + $0xe0] sm:$0xf]
    %v160 = vld [vmem:[#allocation4 + $0xe4] sm:$0xf]
    %v161 = vld [vmem:[#allocation4 + $0xe8] sm:$0xf]
    %v162 = vld [vmem:[#allocation4 + $0xec] sm:$0xf]
    %v163 = vld [vmem:[#allocation4 + $0xf0] sm:$0xf]
    %v164 = vld [vmem:[#allocation4 + $0xf4] sm:$0xf]
    %v165 = vld [vmem:[#allocation4 + $0xf8] sm:$0xf]
    %v166 = vld [vmem:[#allocation4 + $0xfc] sm:$0xf]
    %v167 = vld [vmem:[#allocation4 + $0x100] sm:$0xf]
    %v168 = vld [vmem:[#allocation4 + $0x104] sm:$0xf]
    %v169 = vld [vmem:[#allocation4 + $0x108] sm:$0xf]
    %v170 = vld [vmem:[#allocation4 + $0x10c] sm:$0xf]
    %v171 = vld [vmem:[#allocation4 + $0x110] sm:$0xf]
    %v172 = vld [vmem:[#allocation4 + $0x114] sm:$0xf]
    %v173 = vld [vmem:[#allocation4 + $0x118] sm:$0xf]
    %v174 = vld [vmem:[#allocation4 + $0x11c] sm:$0xf]
    %v175 = vld [vmem:[#allocation4 + $0x120] sm:$0xf]
    %v176 = vld [vmem:[#allocation4 + $0x124] sm:$0xf]
    %v177 = vld [vmem:[#allocation4 + $0x128] sm:$0xf]
    %v178 = vld [vmem:[#allocation4 + $0x12c] sm:$0xf]
    %v179 = vld [vmem:[#allocation4 + $0x130] sm:$0xf]
    %v180 = vld [vmem:[#allocation4 + $0x134] sm:$0xf]
    %v181 = vld [vmem:[#allocation4 + $0x138] sm:$0xf]
    %v182 = vld [vmem:[#allocation4 + $0x13c] sm:$0xf]
    %v183 = vld [vmem:[#allocation4 + $0x140] sm:$0xf]
    %v184 = vld [vmem:[#allocation4 + $0x144] sm:$0xf]
    %v185 = vld [vmem:[#allocation4 + $0x148] sm:$0xf]
    %v186 = vld [vmem:[#allocation4 + $0x14c] sm:$0xf]
    %v187 = vld [vmem:[#allocation4 + $0x150] sm:$0xf]
    %v188 = vld [vmem:[#allocation4 + $0x154] sm:$0xf]
    %v189 = vld [vmem:[#allocation4 + $0x158] sm:$0xf]
    %v190 = vld [vmem:[#allocation4 + $0x15c] sm:$0xf]
    %v191 = vld [vmem:[#allocation4 + $0x160] sm:$0xf]
    %v192 = vld [vmem:[#allocation4 + $0x164] sm:$0xf]
    %v193 = vld [vmem:[#allocation4 + $0x168] sm:$0xf]
    %v194 = vld [vmem:[#allocation4 + $0x16c] sm:$0xf]
    %v195 = vld [vmem:[#allocation4 + $0x170] sm:$0xf]
    %v196 = vld [vmem:[#allocation4 + $0x174] sm:$0xf]
    %v197 = vld [vmem:[#allocation4 + $0x178] sm:$0xf]
    %v198 = vld [vmem:[#allocation4 + $0x17c] sm:$0xf]
    %v199 = vld [vmem:[#allocation4 + $0x180] sm:$0xf]
    %v200 = vld [vmem:[#allocation4 + $0x184] sm:$0xf]
    %v201 = vld [vmem:[#allocation4 + $0x188] sm:$0xf]
    %v202 = vld [vmem:[#allocation4 + $0x18c] sm:$0xf]
    %v203 = vld [vmem:[#allocation4 + $0x190] sm:$0xf]
    %v204 = vld [vmem:[#allocation4 + $0x194] sm:$0xf]
    %v205 = vld [vmem:[#allocation4 + $0x198] sm:$0xf]
    %v206 = vld [vmem:[#allocation4 + $0x19c] sm:$0xf]
    %v207 = vld [vmem:[#allocation4 + $0x1a0] sm:$0xf]
    %v208 = vld [vmem:[#allocation4 + $0x1a4] sm:$0xf]
    %v209 = vld [vmem:[#allocation4 + $0x1a8] sm:$0xf]
    %v210 = vld [vmem:[#allocation4 + $0x1ac] sm:$0xf]
    %v211 = vld [vmem:[#allocation4 + $0x1b0] sm:$0xf]
    %v212 = vld [vmem:[#allocation4 + $0x1b4] sm:$0xf]
    %v213 = vld [vmem:[#allocation4 + $0x1b8] sm:$0xf]
    %v214 = vld [vmem:[#allocation4 + $0x1bc] sm:$0xf]
    %v215 = vld [vmem:[#allocation4 + $0x1c0] sm:$0xf]
    %v216 = vld [vmem:[#allocation4 + $0x1c4] sm:$0xf]
    %v217 = vld [vmem:[#allocation4 + $0x1c8] sm:$0xf]
    %v218 = vld [vmem:[#allocation4 + $0x1cc] sm:$0xf]
    %v219 = vld [vmem:[#allocation4 + $0x1d0] sm:$0xf]
    %v220 = vld [vmem:[#allocation4 + $0x1d4] sm:$0xf]
    %v221 = vld [vmem:[#allocation4 + $0x1d8] sm:$0xf]
    %v222 = vld [vmem:[#allocation4 + $0x1dc] sm:$0xf]
    %v223 = vld [vmem:[#allocation4 + $0x1e0] sm:$0xf]
    %v224 = vld [vmem:[#allocation4 + $0x1e4] sm:$0xf]
    %v225 = vld [vmem:[#allocation4 + $0x1e8] sm:$0xf]
    %v226 = vld [vmem:[#allocation4 + $0x1ec] sm:$0xf]
    %v227 = vld [vmem:[#allocation4 + $0x1f0] sm:$0xf]
    %v228 = vld [vmem:[%s1] sm:$0x3]
    %v229 = vld [vmem:[%s3] sm:$0x1]
    %231 = vset.pattern.permute.xlu0 0
    %232 = vperm.xlu0 %231, %v228
    %v233 = vpop.permute.xlu0 %232
    %v236 = vlaneseq
    %v237 = vshrl.u32 %v236, 7
    %v238 = vsub.s32 0, %v237
    %v239 = vrot.slane %v229, %v238
    %v241 = vmul.f32 %v233, %v239
    %v367 = vunpack.c.l.b16 %v103
    %v368 = vunpack.c.l.b16 %v104
    %v369 = vunpack.c.l.b16 %v105
    %v370 = vunpack.c.l.b16 %v106
    %v371 = vunpack.c.l.b16 %v107
    %v372 = vunpack.c.l.b16 %v108
    %v373 = vunpack.c.l.b16 %v109
    %v374 = vunpack.c.l.b16 %v110
    %v375 = vunpack.c.l.b16 %v111
    %v376 = vunpack.c.l.b16 %v112
    %v377 = vunpack.c.l.b16 %v113
    %v378 = vunpack.c.l.b16 %v114
    %v379 = vunpack.c.l.b16 %v115
    %v380 = vunpack.c.l.b16 %v116
    %v381 = vunpack.c.l.b16 %v117
    %v382 = vunpack.c.l.b16 %v118
    %v383 = vunpack.c.l.b16 %v119
    %v384 = vunpack.c.l.b16 %v120
    %v385 = vunpack.c.l.b16 %v121
    %v386 = vunpack.c.l.b16 %v122
    %v387 = vunpack.c.l.b16 %v123
    %v388 = vunpack.c.l.b16 %v124
    %v389 = vunpack.c.l.b16 %v125
    %v390 = vunpack.c.l.b16 %v126
    %v391 = vunpack.c.l.b16 %v127
    %v392 = vunpack.c.l.b16 %v128
    %v393 = vunpack.c.l.b16 %v129
    %v394 = vunpack.c.l.b16 %v130
    %v395 = vunpack.c.l.b16 %v131
    %v396 = vunpack.c.l.b16 %v132
    %v397 = vunpack.c.l.b16 %v133
    %v398 = vunpack.c.l.b16 %v134
    %v399 = vunpack.c.l.b16 %v135
    %v400 = vunpack.c.l.b16 %v136
    %v401 = vunpack.c.l.b16 %v137
    %v402 = vunpack.c.l.b16 %v138
    %v403 = vunpack.c.l.b16 %v139
    %v404 = vunpack.c.l.b16 %v140
    %v405 = vunpack.c.l.b16 %v141
    %v406 = vunpack.c.l.b16 %v142
    %v407 = vunpack.c.l.b16 %v143
    %v408 = vunpack.c.l.b16 %v144
    %v409 = vunpack.c.l.b16 %v145
    %v410 = vunpack.c.l.b16 %v146
    %v411 = vunpack.c.l.b16 %v147
    %v412 = vunpack.c.l.b16 %v148
    %v413 = vunpack.c.l.b16 %v149
    %v414 = vunpack.c.l.b16 %v150
    %v415 = vunpack.c.l.b16 %v151
    %v416 = vunpack.c.l.b16 %v152
    %v417 = vunpack.c.l.b16 %v153
    %v418 = vunpack.c.l.b16 %v154
    %v419 = vunpack.c.l.b16 %v155
    %v420 = vunpack.c.l.b16 %v156
    %v421 = vunpack.c.l.b16 %v157
    %v422 = vunpack.c.l.b16 %v158
    %v423 = vunpack.c.l.b16 %v159
    %v424 = vunpack.c.l.b16 %v160
    %v425 = vunpack.c.l.b16 %v161
    %v426 = vunpack.c.l.b16 %v162
    %v427 = vunpack.c.l.b16 %v163
    %v428 = vunpack.c.l.b16 %v164
    %v429 = vunpack.c.l.b16 %v165
    %v430 = vunpack.c.l.b16 %v166
    %v431 = vunpack.c.l.b16 %v167
    %v432 = vunpack.c.l.b16 %v168
    %v433 = vunpack.c.l.b16 %v169
    %v434 = vunpack.c.l.b16 %v170
    %v435 = vunpack.c.l.b16 %v171
    %v436 = vunpack.c.l.b16 %v172
    %v437 = vunpack.c.l.b16 %v173
    %v438 = vunpack.c.l.b16 %v174
    %v439 = vunpack.c.l.b16 %v175
    %v440 = vunpack.c.l.b16 %v176
    %v441 = vunpack.c.l.b16 %v177
    %v442 = vunpack.c.l.b16 %v178
    %v443 = vunpack.c.l.b16 %v179
    %v444 = vunpack.c.l.b16 %v180
    %v445 = vunpack.c.l.b16 %v181
    %v446 = vunpack.c.l.b16 %v182
    %v447 = vunpack.c.l.b16 %v183
    %v448 = vunpack.c.l.b16 %v184
    %v449 = vunpack.c.l.b16 %v185
    %v450 = vunpack.c.l.b16 %v186
    %v451 = vunpack.c.l.b16 %v187
    %v452 = vunpack.c.l.b16 %v188
    %v453 = vunpack.c.l.b16 %v189
    %v454 = vunpack.c.l.b16 %v190
    %v455 = vunpack.c.l.b16 %v191
    %v456 = vunpack.c.l.b16 %v192
    %v457 = vunpack.c.l.b16 %v193
    %v458 = vunpack.c.l.b16 %v194
    %v459 = vunpack.c.l.b16 %v195
    %v460 = vunpack.c.l.b16 %v196
    %v461 = vunpack.c.l.b16 %v197
    %v462 = vunpack.c.l.b16 %v198
    %v463 = vunpack.c.l.b16 %v199
    %v464 = vunpack.c.l.b16 %v200
    %v465 = vunpack.c.l.b16 %v201
    %v466 = vunpack.c.l.b16 %v202
    %v467 = vunpack.c.l.b16 %v203
    %v468 = vunpack.c.l.b16 %v204
    %v469 = vunpack.c.l.b16 %v205
    %v470 = vunpack.c.l.b16 %v206
    %v471 = vunpack.c.l.b16 %v207
    %v472 = vunpack.c.l.b16 %v208
    %v473 = vunpack.c.l.b16 %v209
    %v474 = vunpack.c.l.b16 %v210
    %v475 = vunpack.c.l.b16 %v211
    %v476 = vunpack.c.l.b16 %v212
    %v477 = vunpack.c.l.b16 %v213
    %v478 = vunpack.c.l.b16 %v214
    %v479 = vunpack.c.l.b16 %v215
    %v480 = vunpack.c.l.b16 %v216
    %v481 = vunpack.c.l.b16 %v217
    %v482 = vunpack.c.l.b16 %v218
    %v483 = vunpack.c.l.b16 %v219
    %v484 = vunpack.c.l.b16 %v220
    %v485 = vunpack.c.l.b16 %v221
    %v486 = vunpack.c.l.b16 %v222
    %v487 = vunpack.c.l.b16 %v223
    %v488 = vunpack.c.l.b16 %v224
    %v489 = vunpack.c.l.b16 %v225
    %v490 = vunpack.c.l.b16 %v226
    %v491 = vunpack.c.l.b16 %v227
    %v492 = vpack.c.b16 %v368, %v367
    %v493 = vpack.c.b16 %v370, %v369
    %v494 = vpack.c.b16 %v372, %v371
    %v495 = vpack.c.b16 %v374, %v373
    %v496 = vpack.c.b16 %v376, %v375
    %v497 = vpack.c.b16 %v378, %v377
    %v498 = vpack.c.b16 %v380, %v379
    %v499 = vpack.c.b16 %v382, %v381
    %v500 = vpack.c.b16 %v384, %v383
    %v501 = vpack.c.b16 %v386, %v385
    %v502 = vpack.c.b16 %v388, %v387
    %v503 = vpack.c.b16 %v390, %v389
    %v504 = vpack.c.b16 %v392, %v391
    %v505 = vpack.c.b16 %v394, %v393
    %v506 = vpack.c.b16 %v396, %v395
    %v507 = vpack.c.b16 %v398, %v397
    %v508 = vpack.c.b16 %v400, %v399
    %v509 = vpack.c.b16 %v402, %v401
    %v510 = vpack.c.b16 %v404, %v403
    %v511 = vpack.c.b16 %v406, %v405
    %v512 = vpack.c.b16 %v408, %v407
    %v513 = vpack.c.b16 %v410, %v409
    %v514 = vpack.c.b16 %v412, %v411
    %v515 = vpack.c.b16 %v414, %v413
    %v516 = vpack.c.b16 %v416, %v415
    %v517 = vpack.c.b16 %v418, %v417
    %v518 = vpack.c.b16 %v420, %v419
    %v519 = vpack.c.b16 %v422, %v421
    %v520 = vpack.c.b16 %v424, %v423
    %v521 = vpack.c.b16 %v426, %v425
    %v522 = vpack.c.b16 %v428, %v427
    %v523 = vpack.c.b16 %v430, %v429
    %v524 = vpack.c.b16 %v432, %v431
    %v525 = vpack.c.b16 %v434, %v433
    %v526 = vpack.c.b16 %v436, %v435
    %v527 = vpack.c.b16 %v438, %v437
    %v528 = vpack.c.b16 %v440, %v439
    %v529 = vpack.c.b16 %v442, %v441
    %v530 = vpack.c.b16 %v444, %v443
    %v531 = vpack.c.b16 %v446, %v445
    %v532 = vpack.c.b16 %v448, %v447
    %v533 = vpack.c.b16 %v450, %v449
    %v534 = vpack.c.b16 %v452, %v451
    %v535 = vpack.c.b16 %v454, %v453
    %v536 = vpack.c.b16 %v456, %v455
    %v537 = vpack.c.b16 %v458, %v457
    %v538 = vpack.c.b16 %v460, %v459
    %v539 = vpack.c.b16 %v462, %v461
    %v540 = vpack.c.b16 %v464, %v463
    %v541 = vpack.c.b16 %v466, %v465
    %v542 = vpack.c.b16 %v468, %v467
    %v543 = vpack.c.b16 %v470, %v469
    %v544 = vpack.c.b16 %v472, %v471
    %v545 = vpack.c.b16 %v474, %v473
    %v546 = vpack.c.b16 %v476, %v475
    %v547 = vpack.c.b16 %v478, %v477
    %v548 = vpack.c.b16 %v480, %v479
    %v549 = vpack.c.b16 %v482, %v481
    %v550 = vpack.c.b16 %v484, %v483
    %v551 = vpack.c.b16 %v486, %v485
    %v552 = vpack.c.b16 %v488, %v487
    %v553 = vpack.c.b16 %v490, %v489
    %v554 = vpack.c.b16 %v491, %v491
    %vm617 = vcmask 850944
    %v619 = vsel %vm617, %v102, 0
    %vm621 = vcmask 1043456
    %v623 = vsel %vm621, %v554, 0
    %625 = vmatprep.subr.bf16.mxu0 0
    %626 = vmatpush1.bf16.msra.mxu0 %v492
    %627 = vmatprep.subr.bf16.mxu0 0
    %628 = vmatpush1.bf16.msra.mxu0 %v493
    %629 = vmatprep.subr.bf16.mxu0 0
    %630 = vmatpush1.bf16.msra.mxu0 %v494
    %631 = vmatprep.subr.bf16.mxu0 0
    %632 = vmatpush1.bf16.msra.mxu0 %v495
    %633 = vmatprep.subr.bf16.mxu0 0
    %634 = vmatpush1.bf16.msra.mxu0 %v496
    %635 = vmatprep.subr.bf16.mxu0 0
    %636 = vmatpush1.bf16.msra.mxu0 %v497
    %637 = vmatprep.subr.bf16.mxu0 0
    %638 = vmatpush1.bf16.msra.mxu0 %v498
    %639 = vmatprep.subr.bf16.mxu0 0
    %640 = vmatpush1.bf16.msra.mxu0 %v499
    %641 = vmatprep.subr.bf16.mxu0 0
    %642 = vmatpush1.bf16.msra.mxu0 %v500
    %643 = vmatprep.subr.bf16.mxu0 0
    %644 = vmatpush1.bf16.msra.mxu0 %v501
    %645 = vmatprep.subr.bf16.mxu0 0
    %646 = vmatpush1.bf16.msra.mxu0 %v502
    %647 = vmatprep.subr.bf16.mxu0 0
    %648 = vmatpush1.bf16.msra.mxu0 %v503
    %649 = vmatprep.subr.bf16.mxu0 0
    %650 = vmatpush1.bf16.msra.mxu0 %v504
    %651 = vmatprep.subr.bf16.mxu0 0
    %652 = vmatpush1.bf16.msra.mxu0 %v505
    %653 = vmatprep.subr.bf16.mxu0 0
    %654 = vmatpush1.bf16.msra.mxu0 %v506
    %655 = vmatprep.subr.bf16.mxu0 0
    %656 = vmatpush1.bf16.msra.mxu0 %v507
    %657 = vmatprep.mubr.bf16.mxu0 %v96
    %658 = vmatmul.mubr.bf16.gmra.mrb[0].mxu0 %v95
    %v659 = vpop.f32.mrb[0].mxu0
    %v660 = vadd.f32 %v241, %v659
    %v661 = vpop.f32.mrb[0].mxu0
    %v662 = vpop.f32.mrb[0].mxu0
    %v663 = vpop.f32.mrb[0].mxu0
    %664 = vdwg.mxu0
    %665 = vmatprep.subr.bf16.mxu0 0
    %666 = vmatpush1.bf16.msra.mxu0 %v508
    %667 = vmatprep.subr.bf16.mxu0 0
    %668 = vmatpush1.bf16.msra.mxu0 %v509
    %669 = vmatprep.subr.bf16.mxu0 0
    %670 = vmatpush1.bf16.msra.mxu0 %v510
    %671 = vmatprep.subr.bf16.mxu0 0
    %672 = vmatpush1.bf16.msra.mxu0 %v511
    %673 = vmatprep.subr.bf16.mxu0 0
    %674 = vmatpush1.bf16.msra.mxu0 %v512
    %675 = vmatprep.subr.bf16.mxu0 0
    %676 = vmatpush1.bf16.msra.mxu0 %v513
    %677 = vmatprep.subr.bf16.mxu0 0
    %678 = vmatpush1.bf16.msra.mxu0 %v514
    %679 = vmatprep.subr.bf16.mxu0 0
    %680 = vmatpush1.bf16.msra.mxu0 %v515
    %681 = vmatprep.subr.bf16.mxu0 0
    %682 = vmatpush1.bf16.msra.mxu0 %v516
    %683 = vmatprep.subr.bf16.mxu0 0
    %684 = vmatpush1.bf16.msra.mxu0 %v517
    %685 = vmatprep.subr.bf16.mxu0 0
    %686 = vmatpush1.bf16.msra.mxu0 %v518
    %687 = vmatprep.subr.bf16.mxu0 0
    %688 = vmatpush1.bf16.msra.mxu0 %v519
    %689 = vmatprep.subr.bf16.mxu0 0
    %690 = vmatpush1.bf16.msra.mxu0 %v520
    %691 = vmatprep.subr.bf16.mxu0 0
    %692 = vmatpush1.bf16.msra.mxu0 %v521
    %693 = vmatprep.subr.bf16.mxu0 0
    %694 = vmatpush1.bf16.msra.mxu0 %v522
    %695 = vmatprep.subr.bf16.mxu0 0
    %696 = vmatpush1.bf16.msra.mxu0 %v523
    %697 = vmatprep.mubr.bf16.mxu0 %v98
    %698 = vmatmul.mubr.bf16.gmra.mrb[0].mxu0 %v97
    %v699 = vpop.f32.mrb[0].mxu0
    %v700 = vadd.f32 %v660, %v699
    %v701 = vpop.f32.mrb[0].mxu0
    %v702 = vpop.f32.mrb[0].mxu0
    %v703 = vpop.f32.mrb[0].mxu0
    %704 = vdwg.mxu0
    %705 = vmatprep.subr.bf16.mxu0 0
    %706 = vmatpush1.bf16.msra.mxu0 %v524
    %707 = vmatprep.subr.bf16.mxu0 0
    %708 = vmatpush1.bf16.msra.mxu0 %v525
    %709 = vmatprep.subr.bf16.mxu0 0
    %710 = vmatpush1.bf16.msra.mxu0 %v526
    %711 = vmatprep.subr.bf16.mxu0 0
    %712 = vmatpush1.bf16.msra.mxu0 %v527
    %713 = vmatprep.subr.bf16.mxu0 0
    %714 = vmatpush1.bf16.msra.mxu0 %v528
    %715 = vmatprep.subr.bf16.mxu0 0
    %716 = vmatpush1.bf16.msra.mxu0 %v529
    %717 = vmatprep.subr.bf16.mxu0 0
    %718 = vmatpush1.bf16.msra.mxu0 %v530
    %719 = vmatprep.subr.bf16.mxu0 0
    %720 = vmatpush1.bf16.msra.mxu0 %v531
    %721 = vmatprep.subr.bf16.mxu0 0
    %722 = vmatpush1.bf16.msra.mxu0 %v532
    %723 = vmatprep.subr.bf16.mxu0 0
    %724 = vmatpush1.bf16.msra.mxu0 %v533
    %725 = vmatprep.subr.bf16.mxu0 0
    %726 = vmatpush1.bf16.msra.mxu0 %v534
    %727 = vmatprep.subr.bf16.mxu0 0
    %728 = vmatpush1.bf16.msra.mxu0 %v535
    %729 = vmatprep.subr.bf16.mxu0 0
    %730 = vmatpush1.bf16.msra.mxu0 %v536
    %731 = vmatprep.subr.bf16.mxu0 0
    %732 = vmatpush1.bf16.msra.mxu0 %v537
    %733 = vmatprep.subr.bf16.mxu0 0
    %734 = vmatpush1.bf16.msra.mxu0 %v538
    %735 = vmatprep.subr.bf16.mxu0 0
    %736 = vmatpush1.bf16.msra.mxu0 %v539
    %737 = vmatprep.mubr.bf16.mxu0 %v100
    %738 = vmatmul.mubr.bf16.gmra.mrb[0].mxu0 %v99
    %v739 = vpop.f32.mrb[0].mxu0
    %v740 = vadd.f32 %v700, %v739
    %v741 = vpop.f32.mrb[0].mxu0
    %v742 = vpop.f32.mrb[0].mxu0
    %v743 = vpop.f32.mrb[0].mxu0
    %744 = vdwg.mxu0
    %745 = vmatprep.subr.bf16.mxu0 0
    %746 = vmatpush1.bf16.msra.mxu0 %v540
    %747 = vmatprep.subr.bf16.mxu0 0
    %748 = vmatpush1.bf16.msra.mxu0 %v541
    %749 = vmatprep.subr.bf16.mxu0 0
    %750 = vmatpush1.bf16.msra.mxu0 %v542
    %751 = vmatprep.subr.bf16.mxu0 0
    %752 = vmatpush1.bf16.msra.mxu0 %v543
    %753 = vmatprep.subr.bf16.mxu0 0
    %754 = vmatpush1.bf16.msra.mxu0 %v544
    %755 = vmatprep.subr.bf16.mxu0 0
    %756 = vmatpush1.bf16.msra.mxu0 %v545
    %757 = vmatprep.subr.bf16.mxu0 0
    %758 = vmatpush1.bf16.msra.mxu0 %v546
    %759 = vmatprep.subr.bf16.mxu0 0
    %760 = vmatpush1.bf16.msra.mxu0 %v547
    %761 = vmatprep.subr.bf16.mxu0 0
    %762 = vmatpush1.bf16.msra.mxu0 %v548
    %763 = vmatprep.subr.bf16.mxu0 0
    %764 = vmatpush1.bf16.msra.mxu0 %v549
    %765 = vmatprep.subr.bf16.mxu0 0
    %766 = vmatpush1.bf16.msra.mxu0 %v550
    %767 = vmatprep.subr.bf16.mxu0 0
    %768 = vmatpush1.bf16.msra.mxu0 %v551
    %769 = vmatprep.subr.bf16.mxu0 0
    %770 = vmatpush1.bf16.msra.mxu0 %v552
    %771 = vmatprep.subr.bf16.mxu0 0
    %772 = vmatpush1.bf16.msra.mxu0 %v553
    %773 = vmatprep.subr.bf16.mxu0 0
    %774 = vmatpush1.bf16.msra.mxu0 %v623
    %775 = vmatprep.subr.bf16.mxu0 0
    %776 = vmatpush1.bf16.msra.mxu0 0
    %777 = vmatprep.mubr.bf16.mxu0 %v619
    %778 = vmatmul.mubr.bf16.gmra.mrb[0].mxu0 %v101
    %v779 = vpop.f32.mrb[0].mxu0
    %v780 = vadd.f32 %v740, %v779
    %v781 = vpop.f32.mrb[0].mxu0
    %v782 = vpop.f32.mrb[0].mxu0
    %v783 = vpop.f32.mrb[0].mxu0
    %784 = vdwg.mxu0
    %v785 = vld [vmem:[%s4] sm:$0x1]
    %v787 = vlaneseq
    %v788 = vshrl.u32 %v787, 7
    %v789 = vsub.s32 0, %v788
    %v790 = vrot.slane %v785, %v789
    %v792 = vadd.f32 %v780, %v790
    %vm793 = vcmask 1041408
    %v794 = vsel %vm793, %v792, -inf
    %795 = vmax.xlane.f32.xlu0 %v794
    %v796 = vpop.xlane.xlu0 %795
    %v797 = vsub.f32 %v792, %v796
    %v798 = vmul.f32 %v797, 1.442695
    %v799 = vpow.pop %v798
    %v800 = vsel %vm793, %v799, 0.0
    %801 = vadd.xlane.f32.xlu0 %v800
    %v802 = vpop.xlane.xlu0 %801
    %v803 = vrcp.pop %v802
    %v804 = vmul.f32 1.0, %v803
    %v805 = vmul.f32 %v799, %v804
    %v806 = vpack.c.bf16 %v805, %v805
    %807 = vst [vmem:[%s5] sm:$0x1] %v806
    // Predicated region
    $region30: #{model_head.1} parent=1 // pred_check
      _
    $region31: #{model_head.1} parent=1 // pred_check_branch
      %809 = sbr.rel (0) target = $region33
    $region32: #{model_head.1} parent=1 // pred_region
      _
    $region33: #{model_head.1} parent=1 // pred_fallthru
      _
    // Predicated region
    $region34: #{model_head.1} parent=1 // pred_check
      _
    $region35: #{model_head.1} parent=1 // pred_check_branch
      %811 = sbr.rel (0) target = $region37
    $region36: #{model_head.1} parent=1 // pred_region
      _
    $region37: #{model_head.1} parent=1 // pred_fallthru
      _
    %812 = vsyncpa [#allocation3], 1
    %813 = vsyncpa [#allocation5], 1

</llo_original>
